<compile_context>
chip_gen: v5e
topology: v5e:2x2
jax: 0.10.0
libtpu: 0.0.40
codegen_flags: <defaults>
</compile_context>

<pallas_src>
import math
import functools

import jax
import jax.numpy as jnp
from jax import lax
from jax.experimental import pallas as pl
from jax.experimental.pallas import tpu as pltpu


# ----------------------------- tiled matmul kernel ---------------------------

def _tile(dim, target):
    # Use the full extent when the dim is small or does not divide evenly; this keeps
    # blocks aligned (block == full dim) and the accumulation exact.
    return dim if (dim <= target or dim % target != 0) else target


def _matmul_kernel(x_ref, w_ref, b_ref, o_ref, acc_ref, *, mxu_dtype):
    # y = x @ W + b, W pre-transposed to (in, out).  bf16 MXU inputs, f32 accumulate.
    @pl.when(pl.program_id(2) == 0)
    def _():
        acc_ref[...] = jnp.zeros_like(acc_ref)

    acc_ref[...] += jnp.dot(x_ref[...].astype(mxu_dtype),
                            w_ref[...].astype(mxu_dtype),
                            preferred_element_type=jnp.float32)

    @pl.when(pl.program_id(2) == pl.num_programs(2) - 1)
    def _():
        o_ref[...] = (acc_ref[...] + b_ref[...]).astype(o_ref.dtype)


def pallas_linear(x, w, b, *, mxu_dtype=jnp.bfloat16, tm=256, tn=256, tk=512):
    """x: (M, K) f32, w: (K, N) pre-transposed weight, b: (N,) -> (M, N) f32."""
    M, K = x.shape
    K2, N = w.shape
    assert K == K2
    tm, tn, tk = _tile(M, tm), _tile(N, tn), _tile(K, tk)
    grid = (M // tm, N // tn, K // tk)
    return pl.pallas_call(
        functools.partial(_matmul_kernel, mxu_dtype=mxu_dtype),
        out_shape=jax.ShapeDtypeStruct((M, N), jnp.float32),
        grid_spec=pltpu.PrefetchScalarGridSpec(
            num_scalar_prefetch=0,
            grid=grid,
            in_specs=[
                pl.BlockSpec((tm, tk), lambda i, j, k: (i, k)),
                pl.BlockSpec((tk, tn), lambda i, j, k: (k, j)),
                pl.BlockSpec((1, tn), lambda i, j, k: (0, j)),
            ],
            out_specs=pl.BlockSpec((tm, tn), lambda i, j, k: (i, j)),
            scratch_shapes=[pltpu.VMEM((tm, tn), jnp.float32)],
        ),
        compiler_params=pltpu.CompilerParams(
            dimension_semantics=("parallel", "parallel", "arbitrary")),
    )(x, w, b.reshape(1, N))


# ------------------------------ attention kernel -----------------------------

def _attn_kernel(q_ref, k_ref, v_ref, qr_ref, m_ref, out_ref, scores_ref, *,
                 dh, inv_scale, mxu_dtype):
    # q_ref/k_ref/v_ref: (1, S, Hc*dh) combined-head layout
    # qr_ref: (1, Hc, S, S) pre-scaled relative-position scores
    # m_ref:  (1, 1, S, S) additive mask (0 keep, -1e9 masked)
    # out_ref: (1, S, Hc*dh) combined-head output; scores_ref: (1, Hc, S, S)
    n_heads_blk = scores_ref.shape[1]
    amask = m_ref[0, 0]                                            # (S, S)

    for h in range(n_heads_blk):                                   # static unroll
        lo = h * dh
        qh = (q_ref[0, :, lo:lo + dh] * inv_scale).astype(mxu_dtype)   # (S, dh)
        kh = k_ref[0, :, lo:lo + dh].astype(mxu_dtype)
        vh = v_ref[0, :, lo:lo + dh].astype(mxu_dtype)

        # content scores on the MXU: Q K^T (contraction over dh, no explicit transpose)
        s = lax.dot_general(qh, kh, (((1,), (1,)), ((), ())),
                            preferred_element_type=jnp.float32)    # (S, S)
        s = s + qr_ref[0, h] + amask                               # rel term + mask
        scores_ref[0, h] = s                                       # pre-softmax scores

        # numerically-stable softmax in f32; reciprocal on the EUP slot
        m_max = jnp.max(s, axis=-1, keepdims=True)
        e = jnp.exp(s - m_max)
        p = e * pl.reciprocal(jnp.sum(e, axis=-1, keepdims=True), approx=True)

        out_ref[0, :, lo:lo + dh] = jnp.dot(
            p.astype(mxu_dtype), vh,
            preferred_element_type=jnp.float32).astype(out_ref.dtype)


def pallas_attention(q, k, v, qr, add_mask, *, num_heads, dim_qkv, inv_scale,
                     mxu_dtype=jnp.bfloat16, block_heads=None):
    """q,k,v: (B, S, H*dh); qr: (B, H, S, S); add_mask: (B, 1, S, S).

    Returns (attn_out (B, S, H*dh), pre-softmax scores (B, H, S, S))."""
    B, S, D = q.shape
    H, dh = num_heads, dim_qkv
    Hc = H if block_heads is None else block_heads
    assert H % Hc == 0

    kernel = functools.partial(_attn_kernel, dh=dh, inv_scale=inv_scale,
                               mxu_dtype=mxu_dtype)
    return pl.pallas_call(
        kernel,
        out_shape=(
            jax.ShapeDtypeStruct((B, S, D), jnp.float32),
            jax.ShapeDtypeStruct((B, H, S, S), jnp.float32),
        ),
        grid=(B, H // Hc),
        in_specs=[
            pl.BlockSpec((1, S, Hc * dh), lambda b, hc: (b, 0, hc)),
            pl.BlockSpec((1, S, Hc * dh), lambda b, hc: (b, 0, hc)),
            pl.BlockSpec((1, S, Hc * dh), lambda b, hc: (b, 0, hc)),
            pl.BlockSpec((1, Hc, S, S), lambda b, hc: (b, hc, 0, 0)),
            pl.BlockSpec((1, 1, S, S), lambda b, hc: (b, 0, 0, 0)),
        ],
        out_specs=(
            pl.BlockSpec((1, S, Hc * dh), lambda b, hc: (b, 0, hc)),
            pl.BlockSpec((1, Hc, S, S), lambda b, hc: (b, hc, 0, 0)),
        ),
        compiler_params=pltpu.CompilerParams(
            dimension_semantics=("parallel", "parallel")),
    )(q, k, v, qr, add_mask)


# --------------------------- module-level wrapper ---------------------------

class MultiHeadAttentionRelE:
    """JAX/Pallas port of MultiHeadAttention_relE (eval mode, dropout = identity)."""

    def __init__(self, d_model, num_heads, key, mxu_dtype=jnp.bfloat16):
        assert d_model % num_heads == 0
        self.d_model = d_model
        self.num_heads = num_heads
        self.dim_qkv = d_model // num_heads
        self.inv_scale = 1.0 / math.sqrt(self.dim_qkv)
        self.max_relative_position = 16
        self.relative_vocab_size = 2 * self.max_relative_position + 1
        self.mxu_dtype = mxu_dtype

        ks = jax.random.split(key, 9)
        limit = math.sqrt(6.0 / (d_model + d_model))       # xavier-uniform
        bound = 1.0 / math.sqrt(d_model)                   # PyTorch Linear bias init

        def xavier_t(k):
            # nn.Linear weight is (out, in); store pre-transposed (in, out) in bf16
            w = jax.random.uniform(k, (d_model, d_model), jnp.float32, -limit, limit)
            return w.T.astype(mxu_dtype)

        def bias(k):
            return jax.random.uniform(k, (d_model,), jnp.float32, -bound, bound)

        self.w_q, self.b_q = xavier_t(ks[0]), bias(ks[1])
        self.w_k, self.b_k = xavier_t(ks[2]), bias(ks[3])
        self.w_v, self.b_v = xavier_t(ks[4]), bias(ks[5])
        self.w_o, self.b_o = xavier_t(ks[6]), bias(ks[7])
        # fused QKV weights for the self-attention path: one (D, 3D) matmul,
        # X read from HBM once, lane-dense 3D-wide output.
        self.w_qkv = jnp.concatenate([self.w_q, self.w_k, self.w_v], axis=1)
        self.b_qkv = jnp.concatenate([self.b_q, self.b_k, self.b_v])

        rel = jax.random.uniform(ks[8], (self.relative_vocab_size, self.dim_qkv),
                                 jnp.float32, -0.05, 0.05)
        self.relative_embeddings = rel
        # pre-scaled, pre-transposed relative table: qE = q @ (E / scale)^T on the MXU
        self.rel_emb_t = (rel * self.inv_scale).T.astype(mxu_dtype)     # (dh, vocab)
        self.rel_zero_bias = jnp.zeros((self.relative_vocab_size,), jnp.float32)

    def __call__(self, Q, K, V, relative_ids, mask):
        B, S, D = Q.shape
        H, dh, Vr = self.num_heads, self.dim_qkv, self.relative_vocab_size
        dt = self.mxu_dtype

        # ---- projections (tiled Pallas matmuls, weights pre-transposed) ----
        if (Q is K) and (K is V):
            # self-attention: single fused (B*S, D) @ (D, 3D) matmul
            qkv = pallas_linear(Q.reshape(B * S, D), self.w_qkv, self.b_qkv,
                                mxu_dtype=dt)
            q2d, k2d, v2d = qkv[:, :D], qkv[:, D:2 * D], qkv[:, 2 * D:]
        else:
            q2d = pallas_linear(Q.reshape(B * S, D), self.w_q, self.b_q, mxu_dtype=dt)
            k2d = pallas_linear(K.reshape(B * S, D), self.w_k, self.b_k, mxu_dtype=dt)
            v2d = pallas_linear(V.reshape(B * S, D), self.w_v, self.b_v, mxu_dtype=dt)

        # ---- relative-position scores: MXU matmul + small XLA gather ----
        # qE[b,s,h,v] = sum_d Q_h[b,h,s,d] * E[v,d] / scale   (exact for any id table)
        qE = pallas_linear(q2d.reshape(B * S * H, dh), self.rel_emb_t,
                           self.rel_zero_bias, mxu_dtype=dt)
        qE = qE.reshape(B, S, H, Vr).transpose(0, 2, 1, 3)          # (B, H, S, Vr)
        idx = jnp.broadcast_to(relative_ids.astype(jnp.int32)[None, None, :, :],
                               (B, H, S, S))
        qr = jnp.take_along_axis(qE, idx, axis=-1)                  # (B, H, S, S)

        # additive mask: 0 where keep, -1e9 where masked out
        add_mask = (mask.astype(jnp.float32) - 1.0) * 1e9           # (B, 1, S, S)

        # ---- attention (combined-head layout in and out; no XLA transposes) ----
        attn_out, scores = pallas_attention(
            q2d.reshape(B, S, D), k2d.reshape(B, S, D), v2d.reshape(B, S, D),
            qr, add_mask, num_heads=H, dim_qkv=dh,
            inv_scale=self.inv_scale, mxu_dtype=dt)

        # ---- output projection ----
        out = pallas_linear(attn_out.reshape(B * S, D), self.w_o, self.b_o,
                            mxu_dtype=dt).reshape(B, S, D)
        return out, scores


# ---------------------------------- main ------------------------------------

if __name__ == "__main__":
    B, S, d_model, num_heads = 2, 8, 32, 4

    key = jax.random.PRNGKey(0)
    k_mod, k_q, k_k, k_v = jax.random.split(key, 4)

    mha = MultiHeadAttentionRelE(d_model, num_heads, k_mod)

    Q = jax.random.normal(k_q, (B, S, d_model), jnp.float32)
    K = jax.random.normal(k_k, (B, S, d_model), jnp.float32)
    V = jax.random.normal(k_v, (B, S, d_model), jnp.float32)

    # relative_ids[q, k] = clip(k - q, -16, 16) + 16, values in [0, 32]
    pos = jnp.arange(S)
    relative_ids = jnp.clip(pos[None, :] - pos[:, None],
                            -mha.max_relative_position,
                            mha.max_relative_position) + mha.max_relative_position

    # mask: (B, 1, S, S), 1 = keep, 0 = mask out (causal example)
    mask = (pos[None, :] <= pos[:, None]).astype(jnp.float32)
    mask = jnp.broadcast_to(mask[None, None], (B, 1, S, S))

    out, scores = mha(Q, K, V, relative_ids, mask)
    jax.block_until_ready(out)
    jax.block_until_ready(scores)
    assert out.shape == (B, S, d_model)
    assert scores.shape == (B, num_heads, S, S)
    assert bool(jnp.isfinite(out).all())
    assert bool(jnp.isfinite(scores).all())

    # also exercise the fused self-attention (Q is K is V) projection path
    out2, scores2 = mha(Q, Q, Q, relative_ids, mask)
    jax.block_until_ready(out2)
    assert out2.shape == (B, S, d_model)

    print("KERNEL_OK")
</pallas_src>

<mosaic_0001>
module attributes {stable_mosaic.version = 11 : i64} {
  func.func @_matmul_kernel(%arg0: i32, %arg1: i32, %arg2: i32, %arg3: memref<16x32xf32, #tpu.memory_space<vmem>>, %arg4: memref<32x32xbf16, #tpu.memory_space<vmem>>, %arg5: memref<1x32xf32, #tpu.memory_space<vmem>>, %arg6: memref<16x32xf32, #tpu.memory_space<vmem>>, %arg7: memref<16x32xf32, #tpu.memory_space<vmem>>) attributes {dimension_semantics = [#tpu.dimension_semantics<parallel>, #tpu.dimension_semantics<parallel>, #tpu.dimension_semantics<arbitrary>], iteration_bounds = array<i64: 1, 1, 1>, scalar_prefetch = 0 : i64, scratch_operands = 1 : i64, tpu.core_type = #tpu.core_type<tc>, window_params = [{transform_indices = @transform_0, window_bounds = array<i64: 16, 32>}, {transform_indices = @transform_1, window_bounds = array<i64: 32, 32>}, {transform_indices = @transform_2, window_bounds = array<i64: 1, 32>}, {transform_indices = @transform_3, window_bounds = array<i64: 16, 32>}]} {
    %c0_i32 = arith.constant 0 : i32
    %0 = arith.cmpi eq, %arg2, %c0_i32 : i32
    %1 = arith.extui %0 : i1 to i32
    %c0_i32_0 = arith.constant 0 : i32
    %2 = arith.cmpi ne, %1, %c0_i32_0 : i32
    scf.if %2 {
      %cst_10 = arith.constant 0.000000e+00 : f32
      %13 = vector.broadcast %cst_10 : f32 to vector<16x32xf32>
      %c0_11 = arith.constant 0 : index
      %c0_12 = arith.constant 0 : index
      %14 = vector.load %arg7[%c0_11, %c0_12] : memref<16x32xf32, #tpu.memory_space<vmem>>, vector<16x32xf32>
      tpu.vector_store %arg7[%c0_11, %c0_12], %13 {strides = array<i32>} : memref<16x32xf32, #tpu.memory_space<vmem>>, vector<16x32xf32>,
    } else {
    }
    %c0 = arith.constant 0 : index
    %c0_1 = arith.constant 0 : index
    %3 = vector.load %arg7[%c0, %c0_1] : memref<16x32xf32, #tpu.memory_space<vmem>>, vector<16x32xf32>
    %c0_2 = arith.constant 0 : index
    %c0_3 = arith.constant 0 : index
    %4 = vector.load %arg3[%c0_2, %c0_3] : memref<16x32xf32, #tpu.memory_space<vmem>>, vector<16x32xf32>
    %5 = arith.truncf %4 : vector<16x32xf32> to vector<16x32xbf16>
    %c0_4 = arith.constant 0 : index
    %c0_5 = arith.constant 0 : index
    %6 = vector.load %arg4[%c0_4, %c0_5] : memref<32x32xbf16, #tpu.memory_space<vmem>>, vector<32x32xbf16>
    %cst = arith.constant dense<0.000000e+00> : vector<16x32xf32>
    %7 = tpu.matmul %5, %6, %cst {dimension_numbers = #tpu.dot_dimension_numbers<[1], [0], [0], [1], [0, 0, 1, 1], [], []>} : vector<16x32xbf16>, vector<32x32xbf16>, vector<16x32xf32> -> vector<16x32xf32>
    %8 = arith.addf %3, %7 : vector<16x32xf32>
    %c0_6 = arith.constant 0 : index
    %c0_7 = arith.constant 0 : index
    %9 = vector.load %arg7[%c0_6, %c0_7] : memref<16x32xf32, #tpu.memory_space<vmem>>, vector<16x32xf32>
    tpu.vector_store %arg7[%c0_6, %c0_7], %8 {strides = array<i32>} : memref<16x32xf32, #tpu.memory_space<vmem>>, vector<16x32xf32>,
    %c0_i32_8 = arith.constant 0 : i32
    %10 = arith.cmpi eq, %arg2, %c0_i32_8 : i32
    %11 = arith.extui %10 : i1 to i32
    %c0_i32_9 = arith.constant 0 : i32
    %12 = arith.cmpi ne, %11, %c0_i32_9 : i32
    scf.if %12 {
      %c0_10 = arith.constant 0 : index
      %c0_11 = arith.constant 0 : index
      %13 = vector.load %arg7[%c0_10, %c0_11] : memref<16x32xf32, #tpu.memory_space<vmem>>, vector<16x32xf32>
      %c0_12 = arith.constant 0 : index
      %c0_13 = arith.constant 0 : index
      %14 = vector.load %arg5[%c0_12, %c0_13] : memref<1x32xf32, #tpu.memory_space<vmem>>, vector<1x32xf32>
      %15 = vector.broadcast %14 : vector<1x32xf32> to vector<16x32xf32>
      %16 = arith.addf %13, %15 : vector<16x32xf32>
      %c0_14 = arith.constant 0 : index
      %c0_15 = arith.constant 0 : index
      %17 = vector.load %arg6[%c0_14, %c0_15] : memref<16x32xf32, #tpu.memory_space<vmem>>, vector<16x32xf32>
      tpu.vector_store %arg6[%c0_14, %c0_15], %16 {strides = array<i32>} : memref<16x32xf32, #tpu.memory_space<vmem>>, vector<16x32xf32>,
    } else {
    }
    return
  }
  func.func @transform_0(%arg0: i32, %arg1: i32, %arg2: i32) -> (i32, i32) {
    %c0_i32 = arith.constant 0 : i32
    return %arg0, %arg2 : i32, i32
  }
  func.func @transform_1(%arg0: i32, %arg1: i32, %arg2: i32) -> (i32, i32) {
    %c0_i32 = arith.constant 0 : i32
    return %arg2, %arg1 : i32, i32
  }
  func.func @transform_2(%arg0: i32, %arg1: i32, %arg2: i32) -> (i32, i32) {
    %c0_i32 = arith.constant 0 : i32
    %c0_i32_0 = arith.constant 0 : i32
    return %c0_i32, %arg1 : i32, i32
  }
  func.func @transform_3(%arg0: i32, %arg1: i32, %arg2: i32) -> (i32, i32) {
    %c0_i32 = arith.constant 0 : i32
    return %arg0, %arg1 : i32, i32
  }
}

</mosaic_0001>

<llo_original>
// kernel: tpu_custom_call.1
$region0: #{tpu_custom_call.1}
  #allocation0 [shape = 'u32[]', space=smem, size = 0x4, offset = 0x4, fixed_abs, tag = 'smem constant byte address 0x4 - core index']
  #allocation1 [shape = 'u32[72,128]{1,0:T(1,128)}', space=vmem, size = 0x9000, scoped, tag = 'internal scratch']
  #allocation2 [shape = 'f32[16,32]{1,0:T(8,128)}', space=vmem, size = 0x2000, scoped, tag = 'scratch operand']
  %s0 = inlined_call_operand.hbm [shape: f32[16,32], index: 0, kind: input, shape index: {}]
  %s1 = inlined_call_operand.hbm [shape: bf16[32,32], index: 1, kind: input, shape index: {}]
  %s2 = inlined_call_operand.vmem [shape: f32[1,32], index: 2, kind: input, shape index: {}]
  %s3 = inlined_call_operand.hbm [shape: f32[16,32], index: 3, kind: output, shape index: {}]
  %s4 = sld [smem:[#allocation0]]
  $region38: #{tpu_custom_call.1} parent=0
    _
  %s6 = ssub.s32 1, %s4
  %s7 = scalar_select 0, %s6, %s4
  $region1: #{tpu_custom_call.1} parent=0
    #allocation3 [shape = 'u8[8192]{0}', space=vmem, size = 0x2000, scoped, tag = 'input window, operand 0, single buffered']
    #allocation4 [shape = 's32[1]{0}', space=sflag, size = 0x4, scoped, tag = 'scoped memory for tpu_custom_call.1']
    #allocation5 [shape = 's32[1]{0}', space=sflag, size = 0x4, scoped, tag = 'scoped memory for tpu_custom_call.1']
    #allocation6 [shape = 'u8[8192]{0}', space=vmem, size = 0x2000, scoped, tag = 'input window, operand 1, single buffered']
    #allocation7 [shape = 's32[1]{0}', space=sflag, size = 0x4, scoped, tag = 'scoped memory for tpu_custom_call.1']
    #allocation8 [shape = 'u8[8192]{0}', space=vmem, size = 0x2000, scoped, tag = 'output window, operand 0, single buffered']
    %8 = vsyncpa [#allocation4], 0
    %9 = vsyncpa [#allocation7], 0
    %10 = vsyncpa [#allocation5], 0
    // Predicated region
    $region2: #{tpu_custom_call.1} parent=1 // pred_check
      _
    $region3: #{tpu_custom_call.1} parent=1 // pred_check_branch
      %12 = sbr.rel (0) target = $region5
    $region4: #{tpu_custom_call.1} parent=1 // pred_region
      %14 = vsyncadd [#allocation4], 0
      %s15 = sshll.u32 %s0, 4
      %s16 = int_to_ptr.hbm [resolvable:$true] %s15
      %s17 = sshll.u32 [#allocation3], 4
      %s18 = int_to_ptr.vmem [resolvable:$true] %s17
      %23 = dma.hbm_to_vmem [thread:$0]  %s16, 256, %s18, [#allocation4], 128, 128, 8
    $region5: #{tpu_custom_call.1} parent=1 // pred_fallthru
      _
    // Predicated region
    $region6: #{tpu_custom_call.1} parent=1 // pred_check
      _
    $region7: #{tpu_custom_call.1} parent=1 // pred_check_branch
      %25 = sbr.rel (0) target = $region9
    $region8: #{tpu_custom_call.1} parent=1 // pred_region
      %27 = vsyncadd [#allocation7], 0
      %s28 = sshll.u32 %s1, 4
      %s29 = int_to_ptr.hbm [resolvable:$true] %s28
      %s30 = sshll.u32 [#allocation6], 4
      %s31 = int_to_ptr.vmem [resolvable:$true] %s30
      %36 = dma.hbm_to_vmem [thread:$0]  %s29, 256, %s31, [#allocation7], 64, 64, 4
    $region9: #{tpu_custom_call.1} parent=1 // pred_fallthru
      _
    // Predicated region
    $region10: #{tpu_custom_call.1} parent=1 // pred_check
      _
    $region11: #{tpu_custom_call.1} parent=1 // pred_check_branch
      %38 = sbr.rel (0) target = $region13
    $region12: #{tpu_custom_call.1} parent=1 // pred_region
      _
    $region13: #{tpu_custom_call.1} parent=1 // pred_fallthru
      _
    // Predicated region
    $region14: #{tpu_custom_call.1} parent=1 // pred_check
      _
    $region15: #{tpu_custom_call.1} parent=1 // pred_check_branch
      %40 = sbr.rel (0) target = $region17
    $region16: #{tpu_custom_call.1} parent=1 // pred_region
      %42 = dma.done [#allocation4], 256
    $region17: #{tpu_custom_call.1} parent=1 // pred_fallthru
      _
    // Predicated region
    $region18: #{tpu_custom_call.1} parent=1 // pred_check
      _
    $region19: #{tpu_custom_call.1} parent=1 // pred_check_branch
      %44 = sbr.rel (0) target = $region21
    $region20: #{tpu_custom_call.1} parent=1 // pred_region
      %46 = dma.done [#allocation7], 256
    $region21: #{tpu_custom_call.1} parent=1 // pred_fallthru
      _
    %p48 = scmp.eq.s32.totalorder 0, 0
    // Predicated region
    $region22: #{tpu_custom_call.1} parent=1 // pred_check
      %p49 = pneg %p48
    $region23: #{tpu_custom_call.1} parent=1 // pred_check_branch
      %51 = sbr.rel (%p49) target = $region25
    $region24: #{tpu_custom_call.1} parent=1 // pred_region
      %vm52 = vcmask 261120
      %53 = vst.msk [vmem:[#allocation2] sm:$0xff] %vm52, 0.0
      %54 = vst.msk [vmem:[#allocation2 + $0x8] sm:$0xff] %vm52, 0.0
    $region25: #{tpu_custom_call.1} parent=1 // pred_fallthru
      _
    %v55 = vld [vmem:[#allocation2] sm:$0xff]
    %v56 = vld [vmem:[#allocation2 + $0x8] sm:$0xff]
    %v57 = vld [vmem:[#allocation3] sm:$0xff]
    %v58 = vld [vmem:[#allocation3 + $0x8] sm:$0xff]
    %v59 = vpack.c.bf16 %v58, %v57
    %v60 = vld [vmem:[#allocation6] sm:$0xf]
    %v61 = vld [vmem:[#allocation6 + $0x4] sm:$0xf]
    %v62 = vld [vmem:[#allocation6 + $0x8] sm:$0xf]
    %v63 = vld [vmem:[#allocation6 + $0xc] sm:$0xf]
    %v68 = vunpack.c.l.b16 %v60
    %v69 = vunpack.c.l.b16 %v61
    %v70 = vunpack.c.l.b16 %v62
    %v71 = vunpack.c.l.b16 %v63
    %v72 = vpack.c.b16 %v69, %v68
    %v73 = vpack.c.b16 %v71, %v70
    %vm76 = vcmask 261120
    %v78 = vsel %vm76, %v59, 0
    %80 = vmatpush.bf16.msra.mxu0 0
    %81 = vmatpush.bf16.msra.mxu0 0
    %82 = vmatpush.bf16.msra.mxu0 0
    %83 = vmatpush.bf16.msra.mxu0 0
    %84 = vmatpush.bf16.msra.mxu0 0
    %85 = vmatpush.bf16.msra.mxu0 0
    %86 = vmatpush.bf16.msra.mxu0 %v73
    %87 = vmatpush.bf16.msra.mxu0 %v72
    %88 = vmatmul.bf16.gmra.mxu0 %v78
    %v89 = vpop.f32.mrf.mxu0
    %v90 = vadd.f32 0.0, %v89
    %v91 = vpop.f32.mrf.mxu0
    %v92 = vadd.f32 0.0, %v91
    %93 = vdwg.mxu0
    %v94 = vadd.f32 %v55, %v90
    %v95 = vadd.f32 %v56, %v92
    %96 = vst.msk [vmem:[#allocation2] sm:$0xff] %vm76, %v94
    %97 = vst.msk [vmem:[#allocation2 + $0x8] sm:$0xff] %vm76, %v95
    // Predicated region
    $region26: #{tpu_custom_call.1} parent=1 // pred_check
      %p98 = pneg %p48
    $region27: #{tpu_custom_call.1} parent=1 // pred_check_branch
      %100 = sbr.rel (%p98) target = $region29
    $region28: #{tpu_custom_call.1} parent=1 // pred_region
      %v101 = vld [vmem:[#allocation2] sm:$0xff]
      %v102 = vld [vmem:[#allocation2 + $0x8] sm:$0xff]
      %v103 = vld [vmem:[%s2] sm:$0x1]
      %v105 = vperm.slane %v103, 0
      %v107 = vadd.f32 %v101, %v105
      %v108 = vadd.f32 %v102, %v105
      %109 = vst.msk [vmem:[#allocation8] sm:$0xff] %vm76, %v107
      %110 = vst.msk [vmem:[#allocation8 + $0x8] sm:$0xff] %vm76, %v108
    $region29: #{tpu_custom_call.1} parent=1 // pred_fallthru
      _
    // Predicated region
    $region30: #{tpu_custom_call.1} parent=1 // pred_check
      _
    $region31: #{tpu_custom_call.1} parent=1 // pred_check_branch
      %112 = sbr.rel (0) target = $region33
    $region32: #{tpu_custom_call.1} parent=1 // pred_region
      %114 = vsyncadd [#allocation5], 0
      %s115 = sshll.u32 [#allocation8], 4
      %s116 = int_to_ptr.vmem [resolvable:$true] %s115
      %s117 = sshll.u32 %s3, 4
      %s118 = int_to_ptr.hbm [resolvable:$true] %s117
      %123 = dma.vmem_to_hbm [thread:$0]  %s116, 256, %s118, [#allocation5], 128, 128, 8
    $region33: #{tpu_custom_call.1} parent=1 // pred_fallthru
      _
    // Predicated region
    $region34: #{tpu_custom_call.1} parent=1 // pred_check
      _
    $region35: #{tpu_custom_call.1} parent=1 // pred_check_branch
      %125 = sbr.rel (0) target = $region37
    $region36: #{tpu_custom_call.1} parent=1 // pred_region
      %127 = dma.done [#allocation5], 256
    $region37: #{tpu_custom_call.1} parent=1 // pred_fallthru
      _
    %128 = vsyncpa [#allocation4], 1
    %129 = vsyncpa [#allocation7], 1
    %130 = vsyncpa [#allocation5], 1

</llo_original>
